<compile_context>
chip_gen: v6e
topology: v6e:2x2x1
jax: 0.10.0
libtpu: 0.0.40
codegen_flags: <defaults>
</compile_context>

<pallas_src>
import jax
import jax.numpy as jnp
from jax.experimental import pallas as pl
from jax.experimental.pallas import tpu as pltpu


def _round_up(n, m):
    return ((n + m - 1) // m) * m


def _choose_batch_tile(b_aligned, *, max_batch_tile=4096, align=16):
    """Pick the batch tile TB.

    - Tiny batches: use the (16-aligned) batch itself; no point splitting.
    - Large batches: largest multiple of `align` that (a) stays <= max_batch_tile
      and (b) yields >= 2 grid tiles, so the single 'parallel' grid axis can
      shard across both TensorCores on v7x while still amortizing the ~0.35us
      per-grid-step overhead everywhere.
    """
    if b_aligned <= 2 * align:
        return b_aligned
    half = _round_up(-(-b_aligned // 2), align)  # ceil(b/2), aligned
    return max(align, min(max_batch_tile, half))


def tabular_nn_kernel(x_ref,
                      w1_ref, b1_ref,
                      w2_ref, b2_ref,
                      w34_ref, b34_ref,
                      out_ref):
    # Hoist bias reads once (avoids re-materialized broadcasts).
    b1 = b1_ref[...]
    b2 = b2_ref[...]
    b34 = b34_ref[...]

    x = x_ref[...]  # [TB, F] f32

    # Layer 1: Linear(F, H) + ReLU   (dropout = identity in eval mode)
    h1 = jnp.dot(x, w1_ref[...], preferred_element_type=jnp.float32) + b1
    h1 = jnp.maximum(h1, 0.0)

    # Layer 2: Linear(H, H/2) + ReLU (dropout = identity in eval mode)
    h2 = jnp.dot(h1, w2_ref[...], preferred_element_type=jnp.float32) + b2
    h2 = jnp.maximum(h2, 0.0)

    # Layers 3+4 fused: Linear(H/2, H/4) -> Linear(H/4, C) has no activation
    # in between, so W34 = W3 @ W4, b34 = b3 @ W4 + b4 (precomputed on host).
    logits = jnp.dot(h2, w34_ref[...], preferred_element_type=jnp.float32) + b34

    # bf16 store: only place precision is reduced; halves output HBM traffic.
    out_ref[...] = logits.astype(out_ref.dtype)


def tabular_nn_forward(x, params, *, max_batch_tile=4096):
    """x: [B, F] float32; params: dict of (w, b) pairs with w as [in, out]."""
    w1, b1 = params["w1"], params["b1"]
    w2, b2 = params["w2"], params["b2"]
    w3, b3 = params["w3"], params["b3"]
    w4, b4 = params["w4"], params["b4"]

    # Resident BlockSpecs below assume 2-D weights AND 2-D (1, fan_out) biases.
    for b in (b1, b2, b3, b4):
        assert b.ndim == 2 and b.shape[0] == 1, "biases must be shaped (1, fan_out)"

    B, F = x.shape
    H = w1.shape[1]
    half = w2.shape[1]
    C = w4.shape[1]

    # Fuse the activation-free Linear(H/2,H/4) @ Linear(H/4,C) pair (in f32).
    w34 = (w3 @ w4).astype(jnp.float32)        # [half, C]
    b34 = (b3 @ w4 + b4).astype(jnp.float32)   # [1, C]

    # Batch tiling: 16-aligned (sublane pack for the bf16 output), large tiles
    # for big batches, and >= 2 tiles when B is large (v7x megacore sharding).
    B_al = _round_up(B, 16)
    TB = _choose_batch_tile(B_al, max_batch_tile=max_batch_tile)
    num_tiles = pl.cdiv(B_al, TB)
    B_pad = num_tiles * TB

    xp = x if B_pad == B else jnp.pad(x, ((0, B_pad - B), (0, 0)))

    # Weights/biases: full-array blocks, constant index_map => VMEM-resident.
    resident = lambda a: pl.BlockSpec(a.shape, lambda i: (0, 0))

    flops = 2 * B_pad * (F * H + H * half + half * C)
    bytes_accessed = (
        xp.size * 4
        + (w1.size + b1.size + w2.size + b2.size + w34.size + b34.size) * 4
        + B_pad * C * 2  # bf16 logits writeback, unpadded C
    )
    cost = pl.CostEstimate(flops=int(flops), transcendentals=0,
                           bytes_accessed=int(bytes_accessed))

    out_padded = pl.pallas_call(
        tabular_nn_kernel,
        out_shape=jax.ShapeDtypeStruct((B_pad, C), jnp.bfloat16),
        grid=(num_tiles,),
        in_specs=[
            pl.BlockSpec((TB, F), lambda i: (i, 0)),   # x: pipelined per tile
            resident(w1), resident(b1),
            resident(w2), resident(b2),
            resident(w34), resident(b34),
        ],
        # Last block dim == full array dim (C), so the (8,128) rule is satisfied
        # without padding the classifier width in HBM.
        out_specs=pl.BlockSpec((TB, C), lambda i: (i, 0)),
        compiler_params=pltpu.CompilerParams(
            dimension_semantics=("parallel",)),
        cost_estimate=cost,
    )(xp, w1, b1, w2, b2, w34, b34)

    # Slice off padded rows; return f32 like the PyTorch module (tiny cast).
    return out_padded[:B].astype(jnp.float32)


def init_params(key, num_features, hidden_size, num_tar_class):
    """Deterministic init mimicking nn.Linear's U(-1/sqrt(fan_in), 1/sqrt(fan_in))."""
    half = hidden_size // 2
    quarter = half // 2

    dims = [(num_features, hidden_size),
            (hidden_size, half),
            (half, quarter),
            (quarter, num_tar_class)]

    params = {}
    for i, (fan_in, fan_out) in enumerate(dims, start=1):
        key, kw, kb = jax.random.split(key, 3)
        bound = 1.0 / jnp.sqrt(jnp.float32(fan_in))
        w = jax.random.uniform(kw, (fan_in, fan_out), jnp.float32, -bound, bound)
        b = jax.random.uniform(kb, (1, fan_out), jnp.float32, -bound, bound)
        params[f"w{i}"] = w
        params[f"b{i}"] = b
    return params


def reference_forward(x, params):
    """Plain-JAX f32 reference mirroring the PyTorch eval-mode forward (unfused)."""
    h = jnp.dot(x, params["w1"], preferred_element_type=jnp.float32) + params["b1"]
    h = jnp.maximum(h, 0.0)
    h = jnp.dot(h, params["w2"], preferred_element_type=jnp.float32) + params["b2"]
    h = jnp.maximum(h, 0.0)
    h = jnp.dot(h, params["w3"], preferred_element_type=jnp.float32) + params["b3"]
    return jnp.dot(h, params["w4"], preferred_element_type=jnp.float32) + params["b4"]


if __name__ == "__main__":
    # Module hyper-parameters (small, consistent with the forward pass).
    hp = dict(num_features=16, hidden_size=32, num_tar_class=4,
              dropout1=0.1, dropout2=0.1)  # dropouts unused at inference
    batch = 8

    key = jax.random.PRNGKey(0)
    key, kx = jax.random.split(key)
    x = jax.random.normal(kx, (batch, hp["num_features"]), dtype=jnp.float32)

    params = init_params(key, hp["num_features"], hp["hidden_size"],
                         hp["num_tar_class"])

    out = tabular_nn_forward(x, params)
    out = jax.block_until_ready(out)

    ref = reference_forward(x, params)
    assert out.shape == (batch, hp["num_tar_class"])
    # Only deviations from the f32 PyTorch-equivalent reference: the fused
    # (f32) W3@W4 product and the final bf16 store of the logits.
    assert jnp.allclose(out, ref, atol=1e-2, rtol=1e-2), \
        f"max abs err {jnp.max(jnp.abs(out - ref))}"

    print("KERNEL_OK")
</pallas_src>

<mosaic_0001>
module attributes {stable_mosaic.version = 11 : i64} {
  func.func @tabular_nn_kernel(%arg0: i32, %arg1: memref<16x16xf32, #tpu.memory_space<vmem>>, %arg2: memref<16x32xf32, #tpu.memory_space<vmem>>, %arg3: memref<1x32xf32, #tpu.memory_space<vmem>>, %arg4: memref<32x16xf32, #tpu.memory_space<vmem>>, %arg5: memref<1x16xf32, #tpu.memory_space<vmem>>, %arg6: memref<16x4xf32, #tpu.memory_space<vmem>>, %arg7: memref<1x4xf32, #tpu.memory_space<vmem>>, %arg8: memref<16x4xbf16, #tpu.memory_space<vmem>>) attributes {dimension_semantics = [#tpu.dimension_semantics<parallel>], iteration_bounds = array<i64: 1>, scalar_prefetch = 0 : i64, scratch_operands = 0 : i64, tpu.core_type = #tpu.core_type<tc>, window_params = [{transform_indices = @transform_0, window_bounds = array<i64: 16, 16>}, {pipeline_mode = #tpu.pipeline_mode<synchronous>, transform_indices = @transform_1, window_bounds = array<i64: 16, 32>}, {pipeline_mode = #tpu.pipeline_mode<synchronous>, transform_indices = @transform_2, window_bounds = array<i64: 1, 32>}, {pipeline_mode = #tpu.pipeline_mode<synchronous>, transform_indices = @transform_3, window_bounds = array<i64: 32, 16>}, {pipeline_mode = #tpu.pipeline_mode<synchronous>, transform_indices = @transform_4, window_bounds = array<i64: 1, 16>}, {pipeline_mode = #tpu.pipeline_mode<synchronous>, transform_indices = @transform_5, window_bounds = array<i64: 16, 4>}, {pipeline_mode = #tpu.pipeline_mode<synchronous>, transform_indices = @transform_6, window_bounds = array<i64: 1, 4>}, {transform_indices = @transform_7, window_bounds = array<i64: 16, 4>}]} {
    %c0 = arith.constant 0 : index
    %c0_0 = arith.constant 0 : index
    %0 = vector.load %arg3[%c0, %c0_0] : memref<1x32xf32, #tpu.memory_space<vmem>>, vector<1x32xf32>
    %c0_1 = arith.constant 0 : index
    %c0_2 = arith.constant 0 : index
    %1 = vector.load %arg5[%c0_1, %c0_2] : memref<1x16xf32, #tpu.memory_space<vmem>>, vector<1x16xf32>
    %c0_3 = arith.constant 0 : index
    %c0_4 = arith.constant 0 : index
    %2 = vector.load %arg7[%c0_3, %c0_4] : memref<1x4xf32, #tpu.memory_space<vmem>>, vector<1x4xf32>
    %c0_5 = arith.constant 0 : index
    %c0_6 = arith.constant 0 : index
    %3 = vector.load %arg1[%c0_5, %c0_6] : memref<16x16xf32, #tpu.memory_space<vmem>>, vector<16x16xf32>
    %c0_7 = arith.constant 0 : index
    %c0_8 = arith.constant 0 : index
    %4 = vector.load %arg2[%c0_7, %c0_8] : memref<16x32xf32, #tpu.memory_space<vmem>>, vector<16x32xf32>
    %cst = arith.constant dense<0.000000e+00> : vector<16x32xf32>
    %5 = tpu.matmul %3, %4, %cst {dimension_numbers = #tpu.dot_dimension_numbers<[1], [0], [0], [1], [0, 0, 1, 1], [], []>} : vector<16x16xf32>, vector<16x32xf32>, vector<16x32xf32> -> vector<16x32xf32>
    %6 = vector.broadcast %0 : vector<1x32xf32> to vector<16x32xf32>
    %7 = arith.addf %5, %6 : vector<16x32xf32>
    %cst_9 = arith.constant 0.000000e+00 : f32
    %8 = vector.broadcast %cst_9 : f32 to vector<16x32xf32>
    %9 = arith.maximumf %7, %8 : vector<16x32xf32>
    %c0_10 = arith.constant 0 : index
    %c0_11 = arith.constant 0 : index
    %10 = vector.load %arg4[%c0_10, %c0_11] : memref<32x16xf32, #tpu.memory_space<vmem>>, vector<32x16xf32>
    %cst_12 = arith.constant dense<0.000000e+00> : vector<16x16xf32>
    %11 = tpu.matmul %9, %10, %cst_12 {dimension_numbers = #tpu.dot_dimension_numbers<[1], [0], [0], [1], [0, 0, 1, 1], [], []>} : vector<16x32xf32>, vector<32x16xf32>, vector<16x16xf32> -> vector<16x16xf32>
    %12 = vector.broadcast %1 : vector<1x16xf32> to vector<16x16xf32>
    %13 = arith.addf %11, %12 : vector<16x16xf32>
    %cst_13 = arith.constant 0.000000e+00 : f32
    %14 = vector.broadcast %cst_13 : f32 to vector<16x16xf32>
    %15 = arith.maximumf %13, %14 : vector<16x16xf32>
    %c0_14 = arith.constant 0 : index
    %c0_15 = arith.constant 0 : index
    %16 = vector.load %arg6[%c0_14, %c0_15] : memref<16x4xf32, #tpu.memory_space<vmem>>, vector<16x4xf32>
    %cst_16 = arith.constant dense<0.000000e+00> : vector<16x4xf32>
    %17 = tpu.matmul %15, %16, %cst_16 {dimension_numbers = #tpu.dot_dimension_numbers<[1], [0], [0], [1], [0, 0, 1, 1], [], []>} : vector<16x16xf32>, vector<16x4xf32>, vector<16x4xf32> -> vector<16x4xf32>
    %18 = vector.broadcast %2 : vector<1x4xf32> to vector<16x4xf32>
    %19 = arith.addf %17, %18 : vector<16x4xf32>
    %20 = arith.truncf %19 : vector<16x4xf32> to vector<16x4xbf16>
    %c0_17 = arith.constant 0 : index
    %c0_18 = arith.constant 0 : index
    %21 = vector.load %arg8[%c0_17, %c0_18] : memref<16x4xbf16, #tpu.memory_space<vmem>>, vector<16x4xbf16>
    tpu.vector_store %arg8[%c0_17, %c0_18], %20 {strides = array<i32>} : memref<16x4xbf16, #tpu.memory_space<vmem>>, vector<16x4xbf16>,
    return
  }
  func.func @transform_0(%arg0: i32) -> (i32, i32) {
    %c0_i32 = arith.constant 0 : i32
    %c0_i32_0 = arith.constant 0 : i32
    return %arg0, %c0_i32 : i32, i32
  }
  func.func @transform_1(%arg0: i32) -> (i32, i32) {
    %c0_i32 = arith.constant 0 : i32
    %c0_i32_0 = arith.constant 0 : i32
    %c0_i32_1 = arith.constant 0 : i32
    return %c0_i32, %c0_i32_0 : i32, i32
  }
  func.func @transform_2(%arg0: i32) -> (i32, i32) {
    %c0_i32 = arith.constant 0 : i32
    %c0_i32_0 = arith.constant 0 : i32
    %c0_i32_1 = arith.constant 0 : i32
    return %c0_i32, %c0_i32_0 : i32, i32
  }
  func.func @transform_3(%arg0: i32) -> (i32, i32) {
    %c0_i32 = arith.constant 0 : i32
    %c0_i32_0 = arith.constant 0 : i32
    %c0_i32_1 = arith.constant 0 : i32
    return %c0_i32, %c0_i32_0 : i32, i32
  }
  func.func @transform_4(%arg0: i32) -> (i32, i32) {
    %c0_i32 = arith.constant 0 : i32
    %c0_i32_0 = arith.constant 0 : i32
    %c0_i32_1 = arith.constant 0 : i32
    return %c0_i32, %c0_i32_0 : i32, i32
  }
  func.func @transform_5(%arg0: i32) -> (i32, i32) {
    %c0_i32 = arith.constant 0 : i32
    %c0_i32_0 = arith.constant 0 : i32
    %c0_i32_1 = arith.constant 0 : i32
    return %c0_i32, %c0_i32_0 : i32, i32
  }
  func.func @transform_6(%arg0: i32) -> (i32, i32) {
    %c0_i32 = arith.constant 0 : i32
    %c0_i32_0 = arith.constant 0 : i32
    %c0_i32_1 = arith.constant 0 : i32
    return %c0_i32, %c0_i32_0 : i32, i32
  }
  func.func @transform_7(%arg0: i32) -> (i32, i32) {
    %c0_i32 = arith.constant 0 : i32
    %c0_i32_0 = arith.constant 0 : i32
    return %arg0, %c0_i32 : i32, i32
  }
}

</mosaic_0001>

<llo_original>
// kernel: tpu_custom_call.1
$region0: #{tpu_custom_call.1}
  #allocation0 [shape = 'u32[]', space=smem, size = 0x4, offset = 0x4, fixed_abs, tag = 'smem constant byte address 0x4 - core index']
  #allocation1 [shape = 'u32[144,128]{1,0:T(1,128)}', space=vmem, size = 0x12000, scoped, tag = 'internal scratch']
  %s0 = inlined_call_operand.vmem [shape: f32[16,16], index: 0, kind: input, shape index: {}]
  %s1 = inlined_call_operand.vmem [shape: f32[16,32], index: 1, kind: input, shape index: {}]
  %s2 = inlined_call_operand.vmem [shape: f32[1,32], index: 2, kind: input, shape index: {}]
  %s3 = inlined_call_operand.vmem [shape: f32[32,16], index: 3, kind: input, shape index: {}]
  %s4 = inlined_call_operand.vmem [shape: f32[1,16], index: 4, kind: input, shape index: {}]
  %s5 = inlined_call_operand.vmem [shape: f32[16,4], index: 5, kind: input, shape index: {}]
  %s6 = inlined_call_operand.vmem [shape: f32[1,4], index: 6, kind: input, shape index: {}]
  %s7 = inlined_call_operand.vmem [shape: bf16[16,4], index: 7, kind: output, shape index: {}]
  %s8 = sld [smem:[#allocation0]]
  $region38: #{tpu_custom_call.1} parent=0
    _
  %s10 = ssub.s32 1, %s8
  %s11 = scalar_select 0, %s10, %s8
  // Predicated region
  $region2: #{tpu_custom_call.1} parent=0 // pred_check
    _
  $region3: #{tpu_custom_call.1} parent=0 // pred_check_branch
    %13 = sbr.rel (0) target = $region5
  $region4: #{tpu_custom_call.1} parent=0 // pred_region
    _
  $region5: #{tpu_custom_call.1} parent=0 // pred_fallthru
    _
  // Predicated region
  $region6: #{tpu_custom_call.1} parent=0 // pred_check
    _
  $region7: #{tpu_custom_call.1} parent=0 // pred_check_branch
    %15 = sbr.rel (0) target = $region9
  $region8: #{tpu_custom_call.1} parent=0 // pred_region
    _
  $region9: #{tpu_custom_call.1} parent=0 // pred_fallthru
    _
  // Predicated region
  $region10: #{tpu_custom_call.1} parent=0 // pred_check
    _
  $region11: #{tpu_custom_call.1} parent=0 // pred_check_branch
    %17 = sbr.rel (0) target = $region13
  $region12: #{tpu_custom_call.1} parent=0 // pred_region
    _
  $region13: #{tpu_custom_call.1} parent=0 // pred_fallthru
    _
  // Predicated region
  $region14: #{tpu_custom_call.1} parent=0 // pred_check
    _
  $region15: #{tpu_custom_call.1} parent=0 // pred_check_branch
    %19 = sbr.rel (0) target = $region17
  $region16: #{tpu_custom_call.1} parent=0 // pred_region
    _
  $region17: #{tpu_custom_call.1} parent=0 // pred_fallthru
    _
  // Predicated region
  $region18: #{tpu_custom_call.1} parent=0 // pred_check
    _
  $region19: #{tpu_custom_call.1} parent=0 // pred_check_branch
    %21 = sbr.rel (0) target = $region21
  $region20: #{tpu_custom_call.1} parent=0 // pred_region
    _
  $region21: #{tpu_custom_call.1} parent=0 // pred_fallthru
    _
  // Predicated region
  $region22: #{tpu_custom_call.1} parent=0 // pred_check
    _
  $region23: #{tpu_custom_call.1} parent=0 // pred_check_branch
    %23 = sbr.rel (0) target = $region25
  $region24: #{tpu_custom_call.1} parent=0 // pred_region
    _
  $region25: #{tpu_custom_call.1} parent=0 // pred_fallthru
    _
  // Predicated region
  $region26: #{tpu_custom_call.1} parent=0 // pred_check
    _
  $region27: #{tpu_custom_call.1} parent=0 // pred_check_branch
    %25 = sbr.rel (0) target = $region29
  $region28: #{tpu_custom_call.1} parent=0 // pred_region
    _
  $region29: #{tpu_custom_call.1} parent=0 // pred_fallthru
    _
  %v26 = vld [vmem:[%s2] sm:$0x1]
  %v27 = vld [vmem:[%s4] sm:$0x1]
  %v28 = vld [vmem:[%s6] sm:$0x1]
  %v29 = vld [vmem:[%s0] sm:$0xff]
  %v30 = vld [vmem:[%s0 + $0x8] sm:$0xff]
  %v31 = vld [vmem:[%s1] sm:$0xff]
  %v32 = vld [vmem:[%s1 + $0x8] sm:$0xff]
  %v34 = vlaneseq
  %v35 = vshrl.u32 %v34, 7
  %v36 = vsub.s32 0, %v35
  %v37 = vrot.slane %v26, %v36
  %vm39 = vcmask 130048
  %v41 = vsel %vm39, %v29, 0
  %v44 = vsel %vm39, %v30, 0
  %46 = vmatprep.subr.mxu0 0.0
  %47 = vmatpush1.msra.mxu0 0.0
  %48 = vmatprep.subr.mxu0 0.0
  %49 = vmatpush1.msra.mxu0 0.0
  %50 = vmatprep.subr.mxu0 0.0
  %51 = vmatpush1.msra.mxu0 0.0
  %52 = vmatprep.subr.mxu0 0.0
  %53 = vmatpush1.msra.mxu0 0.0
  %54 = vmatprep.subr.mxu0 0.0
  %55 = vmatpush1.msra.mxu0 0.0
  %56 = vmatprep.subr.mxu0 0.0
  %57 = vmatpush1.msra.mxu0 0.0
  %58 = vmatprep.subr.mxu0 0.0
  %59 = vmatpush1.msra.mxu0 0.0
  %60 = vmatprep.subr.mxu0 0.0
  %61 = vmatpush1.msra.mxu0 0.0
  %62 = vmatprep.subr.mxu0 0.0
  %63 = vmatpush1.msra.mxu0 0.0
  %64 = vmatprep.subr.mxu0 0.0
  %65 = vmatpush1.msra.mxu0 0.0
  %66 = vmatprep.subr.mxu0 0.0
  %67 = vmatpush1.msra.mxu0 0.0
  %68 = vmatprep.subr.mxu0 0.0
  %69 = vmatpush1.msra.mxu0 0.0
  %70 = vmatprep.subr.mxu0 0.0
  %71 = vmatpush1.msra.mxu0 0.0
  %72 = vmatprep.subr.mxu0 0.0
  %73 = vmatpush1.msra.mxu0 0.0
  %74 = vmatprep.subr.mxu0 0.0
  %75 = vmatpush1.msra.mxu0 %v32
  %76 = vmatprep.subr.mxu0 0.0
  %77 = vmatpush1.msra.mxu0 %v31
  %78 = vmatprep.subr.mxu0 0.0
  %79 = vmatpush2.msra.mxu0 0.0
  %80 = vmatprep.subr.mxu0 0.0
  %81 = vmatpush2.msra.mxu0 0.0
  %82 = vmatprep.subr.mxu0 0.0
  %83 = vmatpush2.msra.mxu0 0.0
  %84 = vmatprep.subr.mxu0 0.0
  %85 = vmatpush2.msra.mxu0 0.0
  %86 = vmatprep.subr.mxu0 0.0
  %87 = vmatpush2.msra.mxu0 0.0
  %88 = vmatprep.subr.mxu0 0.0
  %89 = vmatpush2.msra.mxu0 0.0
  %90 = vmatprep.subr.mxu0 0.0
  %91 = vmatpush2.msra.mxu0 0.0
  %92 = vmatprep.subr.mxu0 0.0
  %93 = vmatpush2.msra.mxu0 0.0
  %94 = vmatprep.subr.mxu0 0.0
  %95 = vmatpush2.msra.mxu0 0.0
  %96 = vmatprep.subr.mxu0 0.0
  %97 = vmatpush2.msra.mxu0 0.0
  %98 = vmatprep.subr.mxu0 0.0
  %99 = vmatpush2.msra.mxu0 0.0
  %100 = vmatprep.subr.mxu0 0.0
  %101 = vmatpush2.msra.mxu0 0.0
  %102 = vmatprep.subr.mxu0 0.0
  %103 = vmatpush2.msra.mxu0 0.0
  %104 = vmatprep.subr.mxu0 0.0
  %105 = vmatpush2.msra.mxu0 0.0
  %106 = vmatprep.subr.mxu0 0.0
  %107 = vmatpush2.msra.mxu0 0.0
  %108 = vmatprep.subr.mxu0 0.0
  %109 = vmatpush2.msra.mxu0 0.0
  %110 = vmatprep.mubr.f32.mxu0 0.0
  %111 = vmatmul.mubr.f32.gmra.mxu0 %v41
  %v112 = vpop.f32.mrf.mxu0
  %v113 = vadd.f32 %v37, %v112
  %v114 = vpop.f32.mrf.mxu0
  %115 = vmatprep.mubr.f32.mxu0 0.0
  %116 = vmatmul.mubr.f32.gmra.mxu0 %v44
  %v117 = vpop.f32.mrf.mxu0
  %v118 = vadd.f32 %v37, %v117
  %v119 = vpop.f32.mrf.mxu0
  %120 = vdwg.mxu0
  %v121 = vmax.f32 %v113, 0.0
  %v122 = vmax.f32 %v118, 0.0
  %v123 = vld [vmem:[%s3] sm:$0xff]
  %v124 = vld [vmem:[%s3 + $0x8] sm:$0xff]
  %v125 = vld [vmem:[%s3 + $0x10] sm:$0xff]
  %v126 = vld [vmem:[%s3 + $0x18] sm:$0xff]
  %v128 = vlaneseq
  %v129 = vshrl.u32 %v128, 7
  %v130 = vsub.s32 0, %v129
  %v131 = vrot.slane %v27, %v130
  %vm133 = vcmask 261120
  %v135 = vsel %vm133, %v121, 0
  %v138 = vsel %vm133, %v122, 0
  %140 = vmatprep.subr.mxu0 0.0
  %141 = vmatpush1.msra.mxu0 0.0
  %142 = vmatprep.subr.mxu0 0.0
  %143 = vmatpush1.msra.mxu0 0.0
  %144 = vmatprep.subr.mxu0 0.0
  %145 = vmatpush1.msra.mxu0 0.0
  %146 = vmatprep.subr.mxu0 0.0
  %147 = vmatpush1.msra.mxu0 0.0
  %148 = vmatprep.subr.mxu0 0.0
  %149 = vmatpush1.msra.mxu0 0.0
  %150 = vmatprep.subr.mxu0 0.0
  %151 = vmatpush1.msra.mxu0 0.0
  %152 = vmatprep.subr.mxu0 0.0
  %153 = vmatpush1.msra.mxu0 0.0
  %154 = vmatprep.subr.mxu0 0.0
  %155 = vmatpush1.msra.mxu0 0.0
  %156 = vmatprep.subr.mxu0 0.0
  %157 = vmatpush1.msra.mxu0 0.0
  %158 = vmatprep.subr.mxu0 0.0
  %159 = vmatpush1.msra.mxu0 0.0
  %160 = vmatprep.subr.mxu0 0.0
  %161 = vmatpush1.msra.mxu0 0.0
  %162 = vmatprep.subr.mxu0 0.0
  %163 = vmatpush1.msra.mxu0 0.0
  %164 = vmatprep.subr.mxu0 0.0
  %165 = vmatpush1.msra.mxu0 %v126
  %166 = vmatprep.subr.mxu0 0.0
  %167 = vmatpush1.msra.mxu0 %v125
  %168 = vmatprep.subr.mxu0 0.0
  %169 = vmatpush1.msra.mxu0 %v124
  %170 = vmatprep.subr.mxu0 0.0
  %171 = vmatpush1.msra.mxu0 %v123
  %172 = vmatprep.subr.mxu0 0.0
  %173 = vmatpush2.msra.mxu0 0.0
  %174 = vmatprep.subr.mxu0 0.0
  %175 = vmatpush2.msra.mxu0 0.0
  %176 = vmatprep.subr.mxu0 0.0
  %177 = vmatpush2.msra.mxu0 0.0
  %178 = vmatprep.subr.mxu0 0.0
  %179 = vmatpush2.msra.mxu0 0.0
  %180 = vmatprep.subr.mxu0 0.0
  %181 = vmatpush2.msra.mxu0 0.0
  %182 = vmatprep.subr.mxu0 0.0
  %183 = vmatpush2.msra.mxu0 0.0
  %184 = vmatprep.subr.mxu0 0.0
  %185 = vmatpush2.msra.mxu0 0.0
  %186 = vmatprep.subr.mxu0 0.0
  %187 = vmatpush2.msra.mxu0 0.0
  %188 = vmatprep.subr.mxu0 0.0
  %189 = vmatpush2.msra.mxu0 0.0
  %190 = vmatprep.subr.mxu0 0.0
  %191 = vmatpush2.msra.mxu0 0.0
  %192 = vmatprep.subr.mxu0 0.0
  %193 = vmatpush2.msra.mxu0 0.0
  %194 = vmatprep.subr.mxu0 0.0
  %195 = vmatpush2.msra.mxu0 0.0
  %196 = vmatprep.subr.mxu0 0.0
  %197 = vmatpush2.msra.mxu0 0.0
  %198 = vmatprep.subr.mxu0 0.0
  %199 = vmatpush2.msra.mxu0 0.0
  %200 = vmatprep.subr.mxu0 0.0
  %201 = vmatpush2.msra.mxu0 0.0
  %202 = vmatprep.subr.mxu0 0.0
  %203 = vmatpush2.msra.mxu0 0.0
  %204 = vmatprep.mubr.f32.mxu0 0.0
  %205 = vmatmul.mubr.f32.gmra.mxu0 %v135
  %v206 = vpop.f32.mrf.mxu0
  %v207 = vadd.f32 %v131, %v206
  %v208 = vpop.f32.mrf.mxu0
  %209 = vmatprep.mubr.f32.mxu0 0.0
  %210 = vmatmul.mubr.f32.gmra.mxu0 %v138
  %v211 = vpop.f32.mrf.mxu0
  %v212 = vadd.f32 %v131, %v211
  %v213 = vpop.f32.mrf.mxu0
  %214 = vdwg.mxu0
  %v215 = vmax.f32 %v207, 0.0
  %v216 = vmax.f32 %v212, 0.0
  %v217 = vld [vmem:[%s5] sm:$0xff]
  %v218 = vld [vmem:[%s5 + $0x8] sm:$0xff]
  %v220 = vlaneseq
  %v221 = vshrl.u32 %v220, 7
  %v222 = vsub.s32 0, %v221
  %v223 = vrot.slane %v28, %v222
  %v226 = vsel %vm39, %v215, 0
  %v229 = vsel %vm39, %v216, 0
  %231 = vmatprep.subr.mxu0 0.0
  %232 = vmatpush1.msra.mxu0 0.0
  %233 = vmatprep.subr.mxu0 0.0
  %234 = vmatpush1.msra.mxu0 0.0
  %235 = vmatprep.subr.mxu0 0.0
  %236 = vmatpush1.msra.mxu0 0.0
  %237 = vmatprep.subr.mxu0 0.0
  %238 = vmatpush1.msra.mxu0 0.0
  %239 = vmatprep.subr.mxu0 0.0
  %240 = vmatpush1.msra.mxu0 0.0
  %241 = vmatprep.subr.mxu0 0.0
  %242 = vmatpush1.msra.mxu0 0.0
  %243 = vmatprep.subr.mxu0 0.0
  %244 = vmatpush1.msra.mxu0 0.0
  %245 = vmatprep.subr.mxu0 0.0
  %246 = vmatpush1.msra.mxu0 0.0
  %247 = vmatprep.subr.mxu0 0.0
  %248 = vmatpush1.msra.mxu0 0.0
  %249 = vmatprep.subr.mxu0 0.0
  %250 = vmatpush1.msra.mxu0 0.0
  %251 = vmatprep.subr.mxu0 0.0
  %252 = vmatpush1.msra.mxu0 0.0
  %253 = vmatprep.subr.mxu0 0.0
  %254 = vmatpush1.msra.mxu0 0.0
  %255 = vmatprep.subr.mxu0 0.0
  %256 = vmatpush1.msra.mxu0 0.0
  %257 = vmatprep.subr.mxu0 0.0
  %258 = vmatpush1.msra.mxu0 0.0
  %259 = vmatprep.subr.mxu0 0.0
  %260 = vmatpush1.msra.mxu0 %v218
  %261 = vmatprep.subr.mxu0 0.0
  %262 = vmatpush1.msra.mxu0 %v217
  %263 = vmatprep.subr.mxu0 0.0
  %264 = vmatpush2.msra.mxu0 0.0
  %265 = vmatprep.subr.mxu0 0.0
  %266 = vmatpush2.msra.mxu0 0.0
  %267 = vmatprep.subr.mxu0 0.0
  %268 = vmatpush2.msra.mxu0 0.0
  %269 = vmatprep.subr.mxu0 0.0
  %270 = vmatpush2.msra.mxu0 0.0
  %271 = vmatprep.subr.mxu0 0.0
  %272 = vmatpush2.msra.mxu0 0.0
  %273 = vmatprep.subr.mxu0 0.0
  %274 = vmatpush2.msra.mxu0 0.0
  %275 = vmatprep.subr.mxu0 0.0
  %276 = vmatpush2.msra.mxu0 0.0
  %277 = vmatprep.subr.mxu0 0.0
  %278 = vmatpush2.msra.mxu0 0.0
  %279 = vmatprep.subr.mxu0 0.0
  %280 = vmatpush2.msra.mxu0 0.0
  %281 = vmatprep.subr.mxu0 0.0
  %282 = vmatpush2.msra.mxu0 0.0
  %283 = vmatprep.subr.mxu0 0.0
  %284 = vmatpush2.msra.mxu0 0.0
  %285 = vmatprep.subr.mxu0 0.0
  %286 = vmatpush2.msra.mxu0 0.0
  %287 = vmatprep.subr.mxu0 0.0
  %288 = vmatpush2.msra.mxu0 0.0
  %289 = vmatprep.subr.mxu0 0.0
  %290 = vmatpush2.msra.mxu0 0.0
  %291 = vmatprep.subr.mxu0 0.0
  %292 = vmatpush2.msra.mxu0 0.0
  %293 = vmatprep.subr.mxu0 0.0
  %294 = vmatpush2.msra.mxu0 0.0
  %295 = vmatprep.mubr.f32.mxu0 0.0
  %296 = vmatmul.mubr.f32.gmra.mxu0 %v226
  %v297 = vpop.f32.mrf.mxu0
  %v298 = vadd.f32 %v223, %v297
  %v299 = vpop.f32.mrf.mxu0
  %300 = vmatprep.mubr.f32.mxu0 0.0
  %301 = vmatmul.mubr.f32.gmra.mxu0 %v229
  %v302 = vpop.f32.mrf.mxu0
  %v303 = vadd.f32 %v223, %v302
  %v304 = vpop.f32.mrf.mxu0
  %305 = vdwg.mxu0
  %v306 = vpack.c.bf16 %v303, %v298
  %v308 = vunpack.c.l.b16 %v306
  %v309 = vunpack.c.h.b16 %v306
  %v310 = vpack.c.b16 %v308, %v308
  %v311 = vpack.c.b16 %v309, %v309
  %vm314 = vcmask 27648
  %315 = vst.msk [vmem:[%s7] sm:$0xf] %vm314, %v310
  %316 = vst.msk [vmem:[%s7 + $0x4] sm:$0xf] %vm314, %v311
  // Predicated region
  $region30: #{tpu_custom_call.1} parent=0 // pred_check
    _
  $region31: #{tpu_custom_call.1} parent=0 // pred_check_branch
    %318 = sbr.rel (0) target = $region33
  $region32: #{tpu_custom_call.1} parent=0 // pred_region
    _
  $region33: #{tpu_custom_call.1} parent=0 // pred_fallthru
    _
  // Predicated region
  $region34: #{tpu_custom_call.1} parent=0 // pred_check
    _
  $region35: #{tpu_custom_call.1} parent=0 // pred_check_branch
    %320 = sbr.rel (0) target = $region37
  $region36: #{tpu_custom_call.1} parent=0 // pred_region
    _
  $region37: #{tpu_custom_call.1} parent=0 // pred_fallthru
    _

</llo_original>
